<compile_context>
chip_gen: v7x
topology: tpu7x:2x2x1
jax: 0.10.0
libtpu: 0.0.40
codegen_flags: <defaults>
</compile_context>

<pallas_src>
import jax
import jax.numpy as jnp
from jax import lax
from jax.experimental import pallas as pl
from jax.experimental.pallas import tpu as pltpu


def _round_up(x, m):
    return ((x + m - 1) // m) * m


def _vmem_capacity_bytes():
    try:
        return int(pltpu.get_tpu_info().vmem_capacity_bytes)
    except Exception:
        return 64 << 20                      # conservative (v7x per-TC VMEM)


def _clamp_vmem(request_bytes, cap):
    # Never ask for more than physical VMEM minus headroom; never below the
    # generous default either.
    return int(max(32 << 20, min(int(request_bytes), cap - (8 << 20))))


# ---------------------------------------------------------------------------
# Stage 1: V = x2'_flat @ Wt      [B*Tp, F2] @ [F2, Cc*F1]  per class tile
# ---------------------------------------------------------------------------
def _project_kernel(x2_ref, wt_ref, v_ref):
    # x2_ref: [tm1, F2] bf16 ; wt_ref: [F2, Cc*F1] bf16 ; v_ref: [tm1, Cc*F1] bf16
    v_ref[...] = jnp.dot(
        x2_ref[...], wt_ref[...],
        preferred_element_type=jnp.float32,
    ).astype(v_ref.dtype)


# ---------------------------------------------------------------------------
# Stage 2: out_flat = x1' @ V^T (NT matmul) per (batch, j-tile, i-tile)
# ---------------------------------------------------------------------------
def _score_kernel(x1_ref, v_ref, o_ref):
    # x1_ref: [1, tt, F1] bf16 ; v_ref: [1, tt*C, F1] bf16 ; o_ref: [1, tt, tt*C]
    o_ref[0] = lax.dot_general(
        x1_ref[0], v_ref[0],
        dimension_numbers=(((1,), (1,)), ((), ())),   # contract last dims (NT)
        preferred_element_type=jnp.float32,
    ).astype(o_ref.dtype)


def biaffine_forward(x1, x2, bilinear_map, *, tile_t=None, out_dtype=None):
    """x1: [B, T, d1], x2: [B, T, d2], bilinear_map: [d1+1, C, d2+1].
    Returns [B, T, T, C] (matches BiaffineLayer.forward)."""
    B, T, d1 = x1.shape
    _, _, d2 = x2.shape
    f1, C, f2 = bilinear_map.shape
    assert f1 == d1 + 1 and f2 == d2 + 1, (x1.shape, x2.shape, bilinear_map.shape)

    cdt = jnp.bfloat16                        # MXU input dtype; accumulation f32
    out_dtype = x1.dtype if out_dtype is None else jnp.dtype(out_dtype)
    out_isz = jnp.dtype(out_dtype).itemsize

    # Lane-align the (bias-augmented) feature dims. Zero feature columns and
    # zero weight rows contribute nothing, so this is numerically free.
    F1 = _round_up(f1, 128)
    F2 = _round_up(f2, 128)

    vmem_cap = _vmem_capacity_bytes()
    vmem_budget = vmem_cap - (8 << 20)

    # ------------------------- tile-size selection ---------------------------
    T16 = _round_up(T, 16)                    # bf16 sublane packing tile (16,128)
    if tile_t is None:
        tt = None
        for cand in (512, 256, 128):          # largest tile whose stage-2 blocks
            if cand > T16:                    # (double-buffered) fit VMEM
                continue
            need = (2 * cand * F1 * 2                 # x1 block
                    + 2 * cand * C * F1 * 2           # V block
                    + 2 * cand * cand * C * out_isz   # out block
                    + (4 << 20))
            if need <= vmem_budget:
                tt = cand
                break
        if tt is None:
            tt = min(128, T16)                # best effort / tiny-T case
    else:
        tt = max(16, (min(int(tile_t), T16) // 16) * 16)
    Tp = _round_up(T16, tt)
    n_t = Tp // tt

    # ---- padded, bias-augmented activations (single materialization) --------
    def _augment(x, d, F):
        xp = jnp.pad(x.astype(cdt), ((0, 0), (0, Tp - T), (0, F - d)))
        return xp.at[:, :T, d].set(jnp.asarray(1, cdt))    # bias column
    x1p = _augment(x1, d1, F1)                # [B, Tp, F1]
    x2p = _augment(x2, d2, F2)                # [B, Tp, F2]

    # W[p, c, q] -> Wt[q, (c, p)] : [F2, C*F1]   (tiny, param-sized glue).
    w_pad = jnp.pad(bilinear_map,
                    ((0, F1 - f1), (0, 0), (0, F2 - f2))).astype(cdt)
    wt = jnp.transpose(w_pad, (2, 1, 0)).reshape(F2, C * F1)

    # ---------------- Stage 1: fold B*Tp into the M dimension ----------------
    M1 = B * Tp
    x2_flat = x2p.reshape(M1, F2)
    if M1 <= 512:
        tm1 = M1
    else:
        tm1 = next(c for c in (512, 256, 128, tt) if M1 % c == 0)

    # Class tile keeps the resident weight block bounded (v7x: 64 MiB VMEM).
    per_class_wt = F2 * F1 * 2
    wt_budget = max(per_class_wt, vmem_cap // 8)
    cc = next(c for c in range(C, 0, -1)
              if C % c == 0 and c * per_class_wt <= wt_budget)
    n_c = C // cc
    wt_block_bytes = cc * per_class_wt
    # The weight block index never changes along the inner (m) axis; once it is
    # big enough to matter, don't waste VMEM double-buffering it.
    single_buffer_wt = wt_block_bytes > (2 << 20)
    wt_spec_kwargs = dict(pipeline_mode=pl.Buffered(1)) if single_buffer_wt else {}
    wt_bufs = 1 if single_buffer_wt else 2

    v_flat = pl.pallas_call(
        _project_kernel,
        out_shape=jax.ShapeDtypeStruct((M1, C * F1), cdt),
        grid_spec=pltpu.PrefetchScalarGridSpec(
            num_scalar_prefetch=0,
            grid=(n_c, M1 // tm1),            # class tile outer -> wt stays resident
            in_specs=[
                pl.BlockSpec((tm1, F2), lambda c, m: (m, 0)),
                pl.BlockSpec((F2, cc * F1), lambda c, m: (0, c), **wt_spec_kwargs),
            ],
            out_specs=pl.BlockSpec((tm1, cc * F1), lambda c, m: (m, c)),
        ),
        compiler_params=pltpu.CompilerParams(
            dimension_semantics=("parallel", "parallel"),
            vmem_limit_bytes=_clamp_vmem(
                2 * tm1 * F2 * 2 + wt_bufs * wt_block_bytes
                + 2 * tm1 * cc * F1 * 2 + (4 << 20),
                vmem_cap),
        ),
    )(x2_flat, wt)

    # Free reshape: [B*Tp, C*F1] -> [B, Tp*C, F1]  (row inside batch = j*C + c).
    v = v_flat.reshape(B, Tp * C, F1)

    # ------------- Stage 2: tiled NT matmul over the T x T plane -------------
    out_flat = pl.pallas_call(
        _score_kernel,
        out_shape=jax.ShapeDtypeStruct((B, Tp, Tp * C), out_dtype),
        grid_spec=pltpu.PrefetchScalarGridSpec(
            num_scalar_prefetch=0,
            grid=(B, n_t, n_t),               # (b, j-tile, i-tile); i innermost so
                                              # the wide V block is not re-fetched
            in_specs=[
                pl.BlockSpec((1, tt, F1), lambda b, j, i: (b, i, 0)),
                pl.BlockSpec((1, tt * C, F1), lambda b, j, i: (b, j, 0)),
            ],
            out_specs=pl.BlockSpec((1, tt, tt * C), lambda b, j, i: (b, i, j)),
        ),
        compiler_params=pltpu.CompilerParams(
            dimension_semantics=("parallel", "parallel", "parallel"),
            vmem_limit_bytes=_clamp_vmem(
                2 * tt * F1 * 2 + 2 * tt * C * F1 * 2
                + 2 * tt * tt * C * out_isz + (4 << 20),
                vmem_cap),
        ),
    )(x1p, v)

    # Free reshape to the PyTorch layout; slice padding only if any was added.
    out = out_flat.reshape(B, Tp, Tp, C)
    if Tp != T:
        out = out[:, :T, :T, :]
    return out


if __name__ == "__main__":
    # Small synthetic config consistent with the module's forward.
    B, T = 2, 8            # batch, bucket(seq) size
    d1, d2 = 32, 32        # inSize1, inSize2
    C = 4                  # classSize

    key = jax.random.PRNGKey(0)
    k1, k2, kw = jax.random.split(key, 3)
    x1 = jax.random.normal(k1, (B, T, d1), dtype=jnp.float32)
    x2 = jax.random.normal(k2, (B, T, d2), dtype=jnp.float32)
    bilinear_map = 0.1 * jax.random.normal(kw, (d1 + 1, C, d2 + 1),
                                           dtype=jnp.float32)

    out = jax.jit(biaffine_forward)(x1, x2, bilinear_map)
    out = jax.block_until_ready(out)

    # Pure-JAX f32 reference (exact module semantics).
    x1p = jnp.concatenate([x1, jnp.ones((B, T, 1), jnp.float32)], axis=2)
    x2p = jnp.concatenate([x2, jnp.ones((B, T, 1), jnp.float32)], axis=2)
    ref = jnp.einsum("bip,pcq,bjq->bijc", x1p, bilinear_map, x2p)

    assert out.shape == (B, T, T, C), out.shape
    # bf16 MXU inputs / bf16 V intermediate -> loosened tolerance (documented).
    err = float(jnp.max(jnp.abs(out.astype(jnp.float32) - ref)))
    scale = float(jnp.max(jnp.abs(ref)))
    assert err <= 3e-2 * scale + 1e-2, (err, scale)
    print("KERNEL_OK")
</pallas_src>

<mosaic_0001>
module attributes {stable_mosaic.version = 11 : i64} {
  func.func @_project_kernel(%arg0: i32, %arg1: i32, %arg2: memref<32x128xbf16, #tpu.memory_space<vmem>>, %arg3: memref<128x512xbf16, #tpu.memory_space<vmem>>, %arg4: memref<32x512xbf16, #tpu.memory_space<vmem>>) attributes {dimension_semantics = [#tpu.dimension_semantics<parallel>, #tpu.dimension_semantics<parallel>], iteration_bounds = array<i64: 1, 1>, scalar_prefetch = 0 : i64, scratch_operands = 0 : i64, tpu.core_type = #tpu.core_type<tc>, window_params = [{transform_indices = @transform_0, window_bounds = array<i64: 32, 128>}, {transform_indices = @transform_1, window_bounds = array<i64: 128, 512>}, {transform_indices = @transform_2, window_bounds = array<i64: 32, 512>}]} {
    %c0 = arith.constant 0 : index
    %c0_0 = arith.constant 0 : index
    %0 = vector.load %arg2[%c0, %c0_0] : memref<32x128xbf16, #tpu.memory_space<vmem>>, vector<32x128xbf16>
    %c0_1 = arith.constant 0 : index
    %c0_2 = arith.constant 0 : index
    %1 = vector.load %arg3[%c0_1, %c0_2] : memref<128x512xbf16, #tpu.memory_space<vmem>>, vector<128x512xbf16>
    %cst = arith.constant dense<0.000000e+00> : vector<32x512xf32>
    %2 = tpu.matmul %0, %1, %cst {dimension_numbers = #tpu.dot_dimension_numbers<[1], [0], [0], [1], [0, 0, 1, 1], [], []>} : vector<32x128xbf16>, vector<128x512xbf16>, vector<32x512xf32> -> vector<32x512xf32>
    %3 = arith.truncf %2 : vector<32x512xf32> to vector<32x512xbf16>
    %c0_3 = arith.constant 0 : index
    %c0_4 = arith.constant 0 : index
    %4 = vector.load %arg4[%c0_3, %c0_4] : memref<32x512xbf16, #tpu.memory_space<vmem>>, vector<32x512xbf16>
    tpu.vector_store %arg4[%c0_3, %c0_4], %3 {strides = array<i32>} : memref<32x512xbf16, #tpu.memory_space<vmem>>, vector<32x512xbf16>,
    return
  }
  func.func @transform_0(%arg0: i32, %arg1: i32) -> (i32, i32) {
    %c0_i32 = arith.constant 0 : i32
    %c0_i32_0 = arith.constant 0 : i32
    return %arg1, %c0_i32 : i32, i32
  }
  func.func @transform_1(%arg0: i32, %arg1: i32) -> (i32, i32) {
    %c0_i32 = arith.constant 0 : i32
    %c0_i32_0 = arith.constant 0 : i32
    return %c0_i32, %arg0 : i32, i32
  }
  func.func @transform_2(%arg0: i32, %arg1: i32) -> (i32, i32) {
    %c0_i32 = arith.constant 0 : i32
    return %arg1, %arg0 : i32, i32
  }
}

module attributes {stable_mosaic.version = 11 : i64} {
  func.func @_score_kernel(%arg0: i32, %arg1: i32, %arg2: i32, %arg3: memref<1x16x128xbf16, #tpu.memory_space<vmem>>, %arg4: memref<1x64x128xbf16, #tpu.memory_space<vmem>>, %arg5: memref<1x16x64xf32, #tpu.memory_space<vmem>>) attributes {dimension_semantics = [#tpu.dimension_semantics<parallel>, #tpu.dimension_semantics<parallel>, #tpu.dimension_semantics<parallel>], iteration_bounds = array<i64: 2, 1, 1>, scalar_prefetch = 0 : i64, scratch_operands = 0 : i64, tpu.core_type = #tpu.core_type<tc>, window_params = [{transform_indices = @transform_0, window_bounds = array<i64: 1, 16, 128>}, {transform_indices = @transform_1, window_bounds = array<i64: 1, 64, 128>}, {transform_indices = @transform_2, window_bounds = array<i64: 1, 16, 64>}]} {
    %c0 = arith.constant 0 : index
    %c0_0 = arith.constant 0 : index
    %c0_1 = arith.constant 0 : index
    %0 = vector.load %arg3[%c0, %c0_0, %c0_1] : memref<1x16x128xbf16, #tpu.memory_space<vmem>>, vector<1x16x128xbf16>
    %1 = vector.shape_cast %0 : vector<1x16x128xbf16> to vector<16x128xbf16>
    %c0_2 = arith.constant 0 : index
    %c0_3 = arith.constant 0 : index
    %c0_4 = arith.constant 0 : index
    %2 = vector.load %arg4[%c0_2, %c0_3, %c0_4] : memref<1x64x128xbf16, #tpu.memory_space<vmem>>, vector<1x64x128xbf16>
    %3 = vector.shape_cast %2 : vector<1x64x128xbf16> to vector<64x128xbf16>
    %cst = arith.constant dense<0.000000e+00> : vector<16x64xf32>
    %4 = tpu.matmul %1, %3, %cst {dimension_numbers = #tpu.dot_dimension_numbers<[1], [1], [0], [0], [0, 0, 1, 0], [], []>} : vector<16x128xbf16>, vector<64x128xbf16>, vector<16x64xf32> -> vector<16x64xf32>
    %c0_5 = arith.constant 0 : index
    %c0_6 = arith.constant 0 : index
    %c0_7 = arith.constant 0 : index
    %5 = vector.load %arg5[%c0_5, %c0_6, %c0_7] : memref<1x16x64xf32, #tpu.memory_space<vmem>>, vector<1x16x64xf32>
    %6 = vector.shape_cast %5 : vector<1x16x64xf32> to vector<16x64xf32>
    %7 = vector.shape_cast %4 : vector<16x64xf32> to vector<1x16x64xf32>
    tpu.vector_store %arg5[%c0_5, %c0_6, %c0_7], %7 {strides = array<i32>} : memref<1x16x64xf32, #tpu.memory_space<vmem>>, vector<1x16x64xf32>,
    return
  }
  func.func @transform_0(%arg0: i32, %arg1: i32, %arg2: i32) -> (i32, i32, i32) {
    %c0_i32 = arith.constant 0 : i32
    %c0_i32_0 = arith.constant 0 : i32
    return %arg0, %arg2, %c0_i32 : i32, i32, i32
  }
  func.func @transform_1(%arg0: i32, %arg1: i32, %arg2: i32) -> (i32, i32, i32) {
    %c0_i32 = arith.constant 0 : i32
    %c0_i32_0 = arith.constant 0 : i32
    return %arg0, %arg1, %c0_i32 : i32, i32, i32
  }
  func.func @transform_2(%arg0: i32, %arg1: i32, %arg2: i32) -> (i32, i32, i32) {
    %c0_i32 = arith.constant 0 : i32
    return %arg0, %arg2, %arg1 : i32, i32, i32
  }
}

</mosaic_0001>

<llo_original>
// kernel: biaffine_forward.3
$region0: #{biaffine_forward.3}
  #allocation0 [shape = 'u32[]', space=smem, size = 0x4, offset = 0x4, fixed_abs, tag = 'smem constant byte address 0x4 - core index']
  #allocation1 [shape = 'u32[144,128]{1,0:T(1,128)}', space=vmem, size = 0x12000, scoped, tag = 'internal scratch']
  %s0 = inlined_call_operand.vmem [shape: bf16[2,16,128], index: 0, kind: input, shape index: {}]
  %s1 = inlined_call_operand.vmem [shape: bf16[2,64,128], index: 1, kind: input, shape index: {}]
  %s2 = inlined_call_operand.vmem [shape: f32[2,16,64], index: 2, kind: output, shape index: {}]
  %s3 = sld [smem:[#allocation0]]
  $region41: #{biaffine_forward.3} parent=0
    _
  %s5 = ssub.s32 1, %s3
  %s6 = scalar_select 0, %s5, %s3
  loop: start=0, step=1, limit=4
  $region2: #{biaffine_forward.3} parent=0 // loop_pre_header
    _
  $region3: #{biaffine_forward.3} parent=0 // loop_header
    %s8 = sphi 0, %s12
    %p9 = scmp.ge.s32.totalorder %s8, 4
    %s15 = sphi 0, %s34
    %s16 = sphi 0, %s30
    %s17 = sphi 0, %s26
    %s18 = sphi 0, %s15
    %s19 = sphi 0, %s16
    %s20 = sphi 0, %s17
    %s21 = sphi 0, %s18
    %s22 = sphi 0, %s19
    %s23 = sphi 0, %s20
    %s39 = sphi 0, %s41
    %s42 = sphi 0, %s39
    %s43 = sphi 0, %s42
    %s59 = sphi 0, %s43
    %s67 = sphi 0, %s69
    %s70 = sphi 0, %s67
    %s71 = sphi 0, %s70
    %s87 = sphi 0, %s71
    %s97 = sphi 0, %s99
    %s100 = sphi 0, %s97
    %s101 = sphi 0, %s100
    %s117 = sphi 0, %s101
  $region4: #{biaffine_forward.3} parent=0 // loop_header_branch
    %11 = sbr.rel (%p9) target = $region8
  $region5: #{biaffine_forward.3} parent=0 // loop_body
    %s13 = ssub.s32 %s8, 1
    %s14 = ssub.s32 %s8, 2
    %s24 = sadd.s32 1, %s17
    %p25 = scmp.ge.s32.totalorder %s24, 1
    %s26 = scalar_select %p25, 0, %s24
    %s27 = sadd.s32 1, %s16
    %s28 = scalar_select %p25, %s27, %s16
    %p29 = scmp.ge.s32.totalorder %s28, 1
    %s30 = scalar_select %p29, 0, %s28
    %s31 = sadd.s32 1, %s15
    %s32 = scalar_select %p29, %s31, %s15
    %p33 = scmp.ge.s32.totalorder %s32, 2
    %s34 = scalar_select %p33, 0, %s32
    %s35 = ssub.s32 %s15, %s34
    %s36 = ssub.s32 %s17, %s26
    %s37 = sor.u32 %s35, %s36
    %p38 = scmp.eq.s32.totalorder %s37, 0
    %s40 = sadd.s32 %s39, 1
    %s41 = scalar_select %p38, %s39, %s40
    %p44 = pneg %p38
    %p45 = scmp.eq.s32.totalorder %s8, 1
    %p46 = por %p44, %p45
    %p47 = scmp.ne.s32.totalorder %s39, %s42
    %p48 = scmp.eq.s32.totalorder %s8, 0
    %p49 = por %p47, %p48
    %p50 = scmp.ne.s32.totalorder %s39, %s42
    %p51 = scmp.eq.s32.totalorder %s13, 1
    %p52 = por %p50, %p51
    %p53 = scmp.ne.s32.totalorder %s42, %s43
    %p54 = scmp.eq.s32.totalorder %s13, 0
    %p55 = por %p53, %p54
    %p56 = scmp.ne.s32.totalorder %s42, %s43
    %p57 = scmp.eq.s32.totalorder %s14, 1
    %p58 = por %p56, %p57
    %p60 = scmp.ne.s32.totalorder %s43, %s59
    %p61 = scmp.eq.s32.totalorder %s14, 0
    %p62 = por %p60, %p61
    %s63 = ssub.s32 %s15, %s34
    %s64 = ssub.s32 %s16, %s30
    %s65 = sor.u32 %s63, %s64
    %p66 = scmp.eq.s32.totalorder %s65, 0
    %s68 = sadd.s32 %s67, 1
    %s69 = scalar_select %p66, %s67, %s68
    %p72 = pneg %p66
    %p73 = scmp.eq.s32.totalorder %s8, 1
    %p74 = por %p72, %p73
    %p75 = scmp.ne.s32.totalorder %s67, %s70
    %p76 = scmp.eq.s32.totalorder %s8, 0
    %p77 = por %p75, %p76
    %p78 = scmp.ne.s32.totalorder %s67, %s70
    %p79 = scmp.eq.s32.totalorder %s13, 1
    %p80 = por %p78, %p79
    %p81 = scmp.ne.s32.totalorder %s70, %s71
    %p82 = scmp.eq.s32.totalorder %s13, 0
    %p83 = por %p81, %p82
    %p84 = scmp.ne.s32.totalorder %s70, %s71
    %p85 = scmp.eq.s32.totalorder %s14, 1
    %p86 = por %p84, %p85
    %p88 = scmp.ne.s32.totalorder %s71, %s87
    %p89 = scmp.eq.s32.totalorder %s14, 0
    %p90 = por %p88, %p89
    %s91 = ssub.s32 %s15, %s34
    %s92 = ssub.s32 %s17, %s26
    %s93 = sor.u32 %s91, %s92
    %s94 = ssub.s32 %s16, %s30
    %s95 = sor.u32 %s93, %s94
    %p96 = scmp.eq.s32.totalorder %s95, 0
    %s98 = sadd.s32 %s97, 1
    %s99 = scalar_select %p96, %s97, %s98
    %p102 = pneg %p96
    %p103 = scmp.eq.s32.totalorder %s8, 1
    %p104 = por %p102, %p103
    %p105 = scmp.ne.s32.totalorder %s97, %s100
    %p106 = scmp.eq.s32.totalorder %s8, 0
    %p107 = por %p105, %p106
    %p108 = scmp.ne.s32.totalorder %s97, %s100
    %p109 = scmp.eq.s32.totalorder %s13, 1
    %p110 = por %p108, %p109
    %p111 = scmp.ne.s32.totalorder %s100, %s101
    %p112 = scmp.eq.s32.totalorder %s13, 0
    %p113 = por %p111, %p112
    %p114 = scmp.ne.s32.totalorder %s100, %s101
    %p115 = scmp.eq.s32.totalorder %s14, 1
    %p116 = por %p114, %p115
    %p118 = scmp.ne.s32.totalorder %s101, %s117
    %p119 = scmp.eq.s32.totalorder %s14, 0
    %p120 = por %p118, %p119
    %p121 = scmp.le.s32.totalorder 1, %s8
    %p122 = scmp.lt.s32.totalorder %s8, 3
    %p123 = pnand %p121, %p122
    %p124 = pneg %p123
    // Predicated region
    $region9: #{biaffine_forward.3} parent=5 // pred_check
      _
    $region10: #{biaffine_forward.3} parent=5 // pred_check_branch
      %126 = sbr.rel (%p123) target = $region12
    $region11: #{biaffine_forward.3} parent=5 // pred_region
      %s127 = ssub.s32 %s8, 1
    $region12: #{biaffine_forward.3} parent=5 // pred_fallthru
      _
    %p128 = scmp.lt.s32.totalorder %s8, 2
    // Predicated region
    $region13: #{biaffine_forward.3} parent=5 // pred_check
      %p129 = pneg %p128
    $region14: #{biaffine_forward.3} parent=5 // pred_check_branch
      %131 = sbr.rel (%p129) target = $region16
    $region15: #{biaffine_forward.3} parent=5 // pred_region
      // Predicated region
      $region17: #{biaffine_forward.3} parent=15 // pred_check
        %p132 = pneg %p49
      $region18: #{biaffine_forward.3} parent=15 // pred_check_branch
        %134 = sbr.rel (%p132) target = $region20
      $region19: #{biaffine_forward.3} parent=15 // pred_region
        %s135 = smul.u32 2, %s17
        %p136 = scmp.lt.s32.totalorder %s15, 1
        %s137 = scalar_select %p136, %s15, 1
        %p138 = scmp.lt.s32.totalorder %s135, 1
        %s139 = scalar_select %p138, %s135, 1
        %s140 = smul.addr %s137, 2
        %s141 = sadd.s32 %s139, %s140
        %s142 = smul.addr %s141, 4
        %s143 = scalar_lea.vmem %s0, %s142
        %s144 = smul.u32 2, %s17
      $region20: #{biaffine_forward.3} parent=15 // pred_fallthru
        _
      // Predicated region
      $region21: #{biaffine_forward.3} parent=15 // pred_check
        %p145 = pneg %p77
      $region22: #{biaffine_forward.3} parent=15 // pred_check_branch
        %147 = sbr.rel (%p145) target = $region24
      $region23: #{biaffine_forward.3} parent=15 // pred_region
        %s148 = smul.u32 8, %s16
        %p149 = scmp.lt.s32.totalorder %s15, 1
        %s150 = scalar_select %p149, %s15, 1
        %p151 = scmp.lt.s32.totalorder %s148, 7
        %s152 = scalar_select %p151, %s148, 7
        %s153 = smul.addr %s150, 8
        %s154 = sadd.s32 %s152, %s153
        %s155 = smul.addr %s154, 4
        %s156 = scalar_lea.vmem %s1, %s155
        %s157 = smul.u32 8, %s16
      $region24: #{biaffine_forward.3} parent=15 // pred_fallthru
        _
    $region16: #{biaffine_forward.3} parent=5 // pred_fallthru
      _
    %p158 = scmp.le.s32.totalorder 1, %s8
    %p159 = scmp.lt.s32.totalorder %s8, 3
    %p160 = pnand %p158, %p159
    %p161 = pneg %p160
    // Predicated region
    $region25: #{biaffine_forward.3} parent=5 // pred_check
      _
    $region26: #{biaffine_forward.3} parent=5 // pred_check_branch
      %163 = sbr.rel (%p160) target = $region28
    $region27: #{biaffine_forward.3} parent=5 // pred_region
      %s164 = ssub.s32 %s8, 1
      %s165 = smul.u32 2, %s20
      %p166 = scmp.lt.s32.totalorder %s18, 1
      %s167 = scalar_select %p166, %s18, 1
      %p168 = scmp.lt.s32.totalorder %s165, 1
      %s169 = scalar_select %p168, %s165, 1
      %s170 = smul.addr %s167, 2
      %s171 = sadd.s32 %s169, %s170
      %s172 = smul.addr %s171, 4
      %s173 = scalar_lea.vmem %s0, %s172
      %p174 = pneg %p55
      %p175 = pneg %p52
      %s176 = smul.u32 8, %s19
      %p177 = scmp.lt.s32.totalorder %s18, 1
      %s178 = scalar_select %p177, %s18, 1
      %p179 = scmp.lt.s32.totalorder %s176, 7
      %s180 = scalar_select %p179, %s176, 7
      %s181 = smul.addr %s178, 8
      %s182 = sadd.s32 %s180, %s181
      %s183 = smul.addr %s182, 4
      %s184 = scalar_lea.vmem %s1, %s183
      %p185 = pneg %p83
      %p186 = pneg %p80
      %p187 = pneg %p113
      %p188 = pneg %p110
      %s189 = smul.u32 2, %s20
      %p190 = scmp.lt.s32.totalorder %s18, 1
      %s191 = scalar_select %p190, %s18, 1
      %p192 = scmp.lt.s32.totalorder %s189, 1
      %s193 = scalar_select %p192, %s189, 1
      %p194 = scmp.lt.s32.totalorder %s19, 0
      %s195 = scalar_select %p194, %s19, 0
      %s196 = sadd.s32 %s195, %s193
      %s197 = smul.addr %s191, 2
      %s198 = sadd.s32 %s196, %s197
      %s199 = smul.addr %s198, 8
      %s200 = scalar_lea.vmem %s2, %s199
      %s201 = smul.u32 2, %s20
      %p202 = scmp.lt.s32.totalorder %s18, 1
      %s203 = scalar_select %p202, %s18, 1
      %p204 = scmp.lt.s32.totalorder %s201, 1
      %s205 = scalar_select %p204, %s201, 1
      %s206 = smul.addr %s203, 2
      %s207 = sadd.s32 %s205, %s206
      %s208 = smul.addr %s207, 4
      %s209 = scalar_lea.vmem %s0, %s208
      %s210 = smul.u32 2, %s20
      %s211 = smul.u32 8, %s19
      %p212 = scmp.lt.s32.totalorder %s18, 1
      %s213 = scalar_select %p212, %s18, 1
      %p214 = scmp.lt.s32.totalorder %s211, 7
      %s215 = scalar_select %p214, %s211, 7
      %s216 = smul.addr %s213, 8
      %s217 = sadd.s32 %s215, %s216
      %s218 = smul.addr %s217, 4
      %s219 = scalar_lea.vmem %s1, %s218
      %s220 = smul.u32 8, %s19
      %s221 = smul.u32 2, %s20
      %p222 = scmp.lt.s32.totalorder %s18, 1
      %s223 = scalar_select %p222, %s18, 1
      %p224 = scmp.lt.s32.totalorder %s221, 1
      %s225 = scalar_select %p224, %s221, 1
      %p226 = scmp.lt.s32.totalorder %s19, 0
      %s227 = scalar_select %p226, %s19, 0
      %s228 = sadd.s32 %s227, %s225
      %s229 = smul.addr %s223, 2
      %s230 = sadd.s32 %s228, %s229
      %s231 = smul.addr %s230, 8
      %s232 = scalar_lea.vmem %s2, %s231
      %s233 = smul.u32 2, %s20
      %v235 = vld [vmem:[%s209] sm:$0xf]
      %v236 = vld [vmem:[%s209 + $0x4] sm:$0xf]
      %v237 = vld [vmem:[%s219] sm:$0xf]
      %v238 = vld [vmem:[%s219 + $0x4] sm:$0xf]
      %v239 = vld [vmem:[%s219 + $0x8] sm:$0xf]
      %v240 = vld [vmem:[%s219 + $0xc] sm:$0xf]
      %v241 = vld [vmem:[%s219 + $0x10] sm:$0xf]
      %v242 = vld [vmem:[%s219 + $0x14] sm:$0xf]
      %v243 = vld [vmem:[%s219 + $0x18] sm:$0xf]
      %v244 = vld [vmem:[%s219 + $0x1c] sm:$0xf]
      %v247 = vunpack.c.l.b16 %v235
      %v248 = vunpack.c.l.b16 %v236
      %v249 = vpack.c.b16 %v248, %v247
      %v259 = vunpack.c.l.b16 %v237
      %v260 = vunpack.c.l.b16 %v238
      %v261 = vunpack.c.l.b16 %v239
      %v262 = vunpack.c.l.b16 %v240
      %v263 = vunpack.c.l.b16 %v241
      %v264 = vunpack.c.l.b16 %v242
      %v265 = vunpack.c.l.b16 %v243
      %v266 = vunpack.c.l.b16 %v244
      %v267 = vpack.c.b16 %v260, %v259
      %v268 = vpack.c.b16 %v262, %v261
      %v269 = vpack.c.b16 %v264, %v263
      %v270 = vpack.c.b16 %v266, %v265
      %275 = vmatprep.subr.bf16.mxu0 0
      %276 = vmatpush1.bf16.xpose.msra.mxu0 %v267
      %277 = vmatprep.subr.bf16.mxu0 0
      %278 = vmatpush1.bf16.xpose.msra.mxu0 %v268
      %279 = vmatprep.subr.bf16.mxu0 0
      %280 = vmatpush1.bf16.xpose.msra.mxu0 %v269
      %281 = vmatprep.subr.bf16.mxu0 0
      %282 = vmatpush1.bf16.xpose.msra.mxu0 %v270
      %283 = vmatprep.subr.bf16.mxu0 0
      %284 = vmatpush1.bf16.xpose.msra.mxu0 0
      %285 = vmatprep.subr.bf16.mxu0 0
      %286 = vmatpush1.bf16.xpose.msra.mxu0 0
      %287 = vmatprep.subr.bf16.mxu0 0
      %288 = vmatpush1.bf16.xpose.msra.mxu0 0
      %289 = vmatprep.subr.bf16.mxu0 0
      %290 = vmatpush1.bf16.xpose.msra.mxu0 0
      %291 = vmatprep.subr.bf16.mxu0 0
      %292 = vmatpush1.bf16.xpose.msra.mxu0 0
      %293 = vmatprep.subr.bf16.mxu0 0
      %294 = vmatpush1.bf16.xpose.msra.mxu0 0
      %295 = vmatprep.subr.bf16.mxu0 0
      %296 = vmatpush1.bf16.xpose.msra.mxu0 0
      %297 = vmatprep.subr.bf16.mxu0 0
      %298 = vmatpush1.bf16.xpose.msra.mxu0 0
      %299 = vmatprep.subr.bf16.mxu0 0
      %300 = vmatpush1.bf16.xpose.msra.mxu0 0
      %301 = vmatprep.subr.bf16.mxu0 0
      %302 = vmatpush1.bf16.xpose.msra.mxu0 0
      %303 = vmatprep.subr.bf16.mxu0 0
      %304 = vmatpush1.bf16.xpose.msra.mxu0 0
      %305 = vmatprep.subr.bf16.mxu0 0
      %306 = vmatpush1.bf16.xpose.msra.mxu0 0
      %307 = vmatprep.mubr.bf16.mxu0 0
      %308 = vmatmul.mubr.bf16.gmra.mrb[0].mxu0 %v249
      %v309 = vpop.f32.mrb[0].mxu0
      %v310 = vadd.f32 0.0, %v309
      %v311 = vpop.f32.mrb[0].mxu0
      %v312 = vpop.f32.mrb[0].mxu0
      %v313 = vadd.f32 0.0, %v312
      %v314 = vpop.f32.mrb[0].mxu0
      %315 = vdwg.mxu0
      %vm316 = vcmask 523264
      %317 = vst.msk [vmem:[%s232] sm:$0xff] %vm316, %v310
      %318 = vst.msk [vmem:[%s232 + $0x8] sm:$0xff] %vm316, %v313
      %s319 = smul.u32 2, %s20
      %p320 = scmp.lt.s32.totalorder %s18, 1
      %s321 = scalar_select %p320, %s18, 1
      %p322 = scmp.lt.s32.totalorder %s319, 1
      %s323 = scalar_select %p322, %s319, 1
      %p324 = scmp.lt.s32.totalorder %s19, 0
      %s325 = scalar_select %p324, %s19, 0
      %s326 = sadd.s32 %s325, %s323
      %s327 = smul.addr %s321, 2
      %s328 = sadd.s32 %s326, %s327
      %s329 = smul.addr %s328, 8
      %s330 = scalar_lea.vmem %s2, %s329
      // Predicated region
      $region29: #{biaffine_forward.3} parent=27 // pred_check
        %p331 = pneg %p110
      $region30: #{biaffine_forward.3} parent=27 // pred_check_branch
        %333 = sbr.rel (%p331) target = $region32
      $region31: #{biaffine_forward.3} parent=27 // pred_region
        %s334 = smul.u32 2, %s20
      $region32: #{biaffine_forward.3} parent=27 // pred_fallthru
        _
    $region28: #{biaffine_forward.3} parent=5 // pred_fallthru
      _
    %p335 = scmp.le.s32.totalorder 2, %s8
    // Predicated region
    $region33: #{biaffine_forward.3} parent=5 // pred_check
      %p336 = pneg %p335
    $region34: #{biaffine_forward.3} parent=5 // pred_check_branch
      %338 = sbr.rel (%p336) target = $region36
    $region35: #{biaffine_forward.3} parent=5 // pred_region
      %s339 = ssub.s32 %s8, 2
      // Predicated region
      $region37: #{biaffine_forward.3} parent=35 // pred_check
        %p340 = pneg %p116
      $region38: #{biaffine_forward.3} parent=35 // pred_check_branch
        %342 = sbr.rel (%p340) target = $region40
      $region39: #{biaffine_forward.3} parent=35 // pred_region
        %s343 = smul.u32 2, %s23
        %p344 = scmp.lt.s32.totalorder %s21, 1
        %s345 = scalar_select %p344, %s21, 1
        %p346 = scmp.lt.s32.totalorder %s343, 1
        %s347 = scalar_select %p346, %s343, 1
        %p348 = scmp.lt.s32.totalorder %s22, 0
        %s349 = scalar_select %p348, %s22, 0
        %s350 = sadd.s32 %s349, %s347
        %s351 = smul.addr %s345, 2
        %s352 = sadd.s32 %s350, %s351
        %s353 = smul.addr %s352, 8
        %s354 = scalar_lea.vmem %s2, %s353
      $region40: #{biaffine_forward.3} parent=35 // pred_fallthru
        _
    $region36: #{biaffine_forward.3} parent=5 // pred_fallthru
      _
  $region6: #{biaffine_forward.3} parent=0 // loop_footer
    %s12 = sadd.s32 1, %s8
  $region7: #{biaffine_forward.3} parent=0 // loop_footer_branch
    %7 = sbr.rel target = $region3
  $region8: #{biaffine_forward.3} parent=0 // loop_exit
    _

// kernel: biaffine_forward.2
$region0: #{biaffine_forward.2}
  #allocation0 [shape = 'u32[]', space=smem, size = 0x4, offset = 0x4, fixed_abs, tag = 'smem constant byte address 0x4 - core index']
  #allocation1 [shape = 'u32[144,128]{1,0:T(1,128)}', space=vmem, size = 0x12000, scoped, tag = 'internal scratch']
  %s0 = inlined_call_operand.vmem [shape: bf16[32,128], index: 0, kind: input, shape index: {}]
  %s1 = inlined_call_operand.vmem [shape: bf16[128,512], index: 1, kind: input, shape index: {}]
  %s2 = inlined_call_operand.vmem [shape: bf16[32,512], index: 2, kind: output, shape index: {}]
  %s3 = sld [smem:[#allocation0]]
  $region18: #{biaffine_forward.2} parent=0
    _
  %s5 = ssub.s32 1, %s3
  %s6 = scalar_select 0, %s5, %s3
  // Predicated region
  $region2: #{biaffine_forward.2} parent=0 // pred_check
    _
  $region3: #{biaffine_forward.2} parent=0 // pred_check_branch
    %8 = sbr.rel (0) target = $region5
  $region4: #{biaffine_forward.2} parent=0 // pred_region
    _
  $region5: #{biaffine_forward.2} parent=0 // pred_fallthru
    _
  // Predicated region
  $region6: #{biaffine_forward.2} parent=0 // pred_check
    _
  $region7: #{biaffine_forward.2} parent=0 // pred_check_branch
    %10 = sbr.rel (0) target = $region9
  $region8: #{biaffine_forward.2} parent=0 // pred_region
    _
  $region9: #{biaffine_forward.2} parent=0 // pred_fallthru
    _
  %v12 = vld [vmem:[%s0] sm:$0xf]
  %v13 = vld [vmem:[%s0 + $0x4] sm:$0xf]
  %v14 = vld [vmem:[%s0 + $0x8] sm:$0xf]
  %v15 = vld [vmem:[%s0 + $0xc] sm:$0xf]
  %v16 = vld [vmem:[%s1] sm:$0xff]
  %v17 = vld [vmem:[%s1 + $0x8] sm:$0xff]
  %v18 = vld [vmem:[%s1 + $0x10] sm:$0xff]
  %v19 = vld [vmem:[%s1 + $0x18] sm:$0xff]
  %v20 = vld [vmem:[%s1 + $0x20] sm:$0xff]
  %v21 = vld [vmem:[%s1 + $0x28] sm:$0xff]
  %v22 = vld [vmem:[%s1 + $0x30] sm:$0xff]
  %v23 = vld [vmem:[%s1 + $0x38] sm:$0xff]
  %v24 = vld [vmem:[%s1 + $0x40] sm:$0xff]
  %v25 = vld [vmem:[%s1 + $0x48] sm:$0xff]
  %v26 = vld [vmem:[%s1 + $0x50] sm:$0xff]
  %v27 = vld [vmem:[%s1 + $0x58] sm:$0xff]
  %v28 = vld [vmem:[%s1 + $0x60] sm:$0xff]
  %v29 = vld [vmem:[%s1 + $0x68] sm:$0xff]
  %v30 = vld [vmem:[%s1 + $0x70] sm:$0xff]
  %v31 = vld [vmem:[%s1 + $0x78] sm:$0xff]
  %v32 = vld [vmem:[%s1 + $0x80] sm:$0xff]
  %v33 = vld [vmem:[%s1 + $0x88] sm:$0xff]
  %v34 = vld [vmem:[%s1 + $0x90] sm:$0xff]
  %v35 = vld [vmem:[%s1 + $0x98] sm:$0xff]
  %v36 = vld [vmem:[%s1 + $0xa0] sm:$0xff]
  %v37 = vld [vmem:[%s1 + $0xa8] sm:$0xff]
  %v38 = vld [vmem:[%s1 + $0xb0] sm:$0xff]
  %v39 = vld [vmem:[%s1 + $0xb8] sm:$0xff]
  %v40 = vld [vmem:[%s1 + $0xc0] sm:$0xff]
  %v41 = vld [vmem:[%s1 + $0xc8] sm:$0xff]
  %v42 = vld [vmem:[%s1 + $0xd0] sm:$0xff]
  %v43 = vld [vmem:[%s1 + $0xd8] sm:$0xff]
  %v44 = vld [vmem:[%s1 + $0xe0] sm:$0xff]
  %v45 = vld [vmem:[%s1 + $0xe8] sm:$0xff]
  %v46 = vld [vmem:[%s1 + $0xf0] sm:$0xff]
  %v47 = vld [vmem:[%s1 + $0xf8] sm:$0xff]
  %v52 = vunpack.c.l.b16 %v12
  %v53 = vunpack.c.l.b16 %v13
  %v54 = vunpack.c.l.b16 %v14
  %v55 = vunpack.c.l.b16 %v15
  %v56 = vpack.c.b16 %v53, %v52
  %v57 = vpack.c.b16 %v55, %v54
  %v92 = vunpack.c.l.b16 %v16
  %v93 = vunpack.c.h.b16 %v16
  %v94 = vunpack.c.l.b16 %v17
  %v95 = vunpack.c.h.b16 %v17
  %v96 = vunpack.c.l.b16 %v18
  %v97 = vunpack.c.h.b16 %v18
  %v98 = vunpack.c.l.b16 %v19
  %v99 = vunpack.c.h.b16 %v19
  %v100 = vunpack.c.l.b16 %v20
  %v101 = vunpack.c.h.b16 %v20
  %v102 = vunpack.c.l.b16 %v21
  %v103 = vunpack.c.h.b16 %v21
  %v104 = vunpack.c.l.b16 %v22
  %v105 = vunpack.c.h.b16 %v22
  %v106 = vunpack.c.l.b16 %v23
  %v107 = vunpack.c.h.b16 %v23
  %v108 = vunpack.c.l.b16 %v24
  %v109 = vunpack.c.h.b16 %v24
  %v110 = vunpack.c.l.b16 %v25
  %v111 = vunpack.c.h.b16 %v25
  %v112 = vunpack.c.l.b16 %v26
  %v113 = vunpack.c.h.b16 %v26
  %v114 = vunpack.c.l.b16 %v27
  %v115 = vunpack.c.h.b16 %v27
  %v116 = vunpack.c.l.b16 %v28
  %v117 = vunpack.c.h.b16 %v28
  %v118 = vunpack.c.l.b16 %v29
  %v119 = vunpack.c.h.b16 %v29
  %v120 = vunpack.c.l.b16 %v30
  %v121 = vunpack.c.h.b16 %v30
  %v122 = vunpack.c.l.b16 %v31
  %v123 = vunpack.c.h.b16 %v31
  %v124 = vunpack.c.l.b16 %v32
  %v125 = vunpack.c.h.b16 %v32
  %v126 = vunpack.c.l.b16 %v33
  %v127 = vunpack.c.h.b16 %v33
  %v128 = vunpack.c.l.b16 %v34
  %v129 = vunpack.c.h.b16 %v34
  %v130 = vunpack.c.l.b16 %v35
  %v131 = vunpack.c.h.b16 %v35
  %v132 = vunpack.c.l.b16 %v36
  %v133 = vunpack.c.h.b16 %v36
  %v134 = vunpack.c.l.b16 %v37
  %v135 = vunpack.c.h.b16 %v37
  %v136 = vunpack.c.l.b16 %v38
  %v137 = vunpack.c.h.b16 %v38
  %v138 = vunpack.c.l.b16 %v39
  %v139 = vunpack.c.h.b16 %v39
  %v140 = vunpack.c.l.b16 %v40
  %v141 = vunpack.c.h.b16 %v40
  %v142 = vunpack.c.l.b16 %v41
  %v143 = vunpack.c.h.b16 %v41
  %v144 = vunpack.c.l.b16 %v42
  %v145 = vunpack.c.h.b16 %v42
  %v146 = vunpack.c.l.b16 %v43
  %v147 = vunpack.c.h.b16 %v43
  %v148 = vunpack.c.l.b16 %v44
  %v149 = vunpack.c.h.b16 %v44
  %v150 = vunpack.c.l.b16 %v45
  %v151 = vunpack.c.h.b16 %v45
  %v152 = vunpack.c.l.b16 %v46
  %v153 = vunpack.c.h.b16 %v46
  %v154 = vunpack.c.l.b16 %v47
  %v155 = vunpack.c.h.b16 %v47
  %v156 = vpack.c.b16 %v96, %v92
  %v157 = vpack.c.b16 %v97, %v93
  %v158 = vpack.c.b16 %v98, %v94
  %v159 = vpack.c.b16 %v99, %v95
  %v160 = vpack.c.b16 %v104, %v100
  %v161 = vpack.c.b16 %v105, %v101
  %v162 = vpack.c.b16 %v106, %v102
  %v163 = vpack.c.b16 %v107, %v103
  %v164 = vpack.c.b16 %v112, %v108
  %v165 = vpack.c.b16 %v113, %v109
  %v166 = vpack.c.b16 %v114, %v110
  %v167 = vpack.c.b16 %v115, %v111
  %v168 = vpack.c.b16 %v120, %v116
  %v169 = vpack.c.b16 %v121, %v117
  %v170 = vpack.c.b16 %v122, %v118
  %v171 = vpack.c.b16 %v123, %v119
  %v172 = vpack.c.b16 %v128, %v124
  %v173 = vpack.c.b16 %v129, %v125
  %v174 = vpack.c.b16 %v130, %v126
  %v175 = vpack.c.b16 %v131, %v127
  %v176 = vpack.c.b16 %v136, %v132
  %v177 = vpack.c.b16 %v137, %v133
  %v178 = vpack.c.b16 %v138, %v134
  %v179 = vpack.c.b16 %v139, %v135
  %v180 = vpack.c.b16 %v144, %v140
  %v181 = vpack.c.b16 %v145, %v141
  %v182 = vpack.c.b16 %v146, %v142
  %v183 = vpack.c.b16 %v147, %v143
  %v184 = vpack.c.b16 %v152, %v148
  %v185 = vpack.c.b16 %v153, %v149
  %v186 = vpack.c.b16 %v154, %v150
  %v187 = vpack.c.b16 %v155, %v151
  %220 = vmatprep.subr.bf16.mxu0 %v157
  %221 = vmatpush1.bf16.msra.mxu0 %v156
  %222 = vmatprep.subr.bf16.mxu0 %v161
  %223 = vmatpush1.bf16.msra.mxu0 %v160
  %224 = vmatprep.subr.bf16.mxu0 %v165
  %225 = vmatpush1.bf16.msra.mxu0 %v164
  %226 = vmatprep.subr.bf16.mxu0 %v169
  %227 = vmatpush1.bf16.msra.mxu0 %v168
  %228 = vmatprep.subr.bf16.mxu0 %v173
  %229 = vmatpush1.bf16.msra.mxu0 %v172
  %230 = vmatprep.subr.bf16.mxu0 %v177
  %231 = vmatpush1.bf16.msra.mxu0 %v176
  %232 = vmatprep.subr.bf16.mxu0 %v181
  %233 = vmatpush1.bf16.msra.mxu0 %v180
  %234 = vmatprep.subr.bf16.mxu0 %v185
  %235 = vmatpush1.bf16.msra.mxu0 %v184
  %236 = vmatprep.subr.bf16.mxu0 0
  %237 = vmatpush1.bf16.msra.mxu0 0
  %238 = vmatprep.subr.bf16.mxu0 0
  %239 = vmatpush1.bf16.msra.mxu0 0
  %240 = vmatprep.subr.bf16.mxu0 0
  %241 = vmatpush1.bf16.msra.mxu0 0
  %242 = vmatprep.subr.bf16.mxu0 0
  %243 = vmatpush1.bf16.msra.mxu0 0
  %244 = vmatprep.subr.bf16.mxu0 0
  %245 = vmatpush1.bf16.msra.mxu0 0
  %246 = vmatprep.subr.bf16.mxu0 0
  %247 = vmatpush1.bf16.msra.mxu0 0
  %248 = vmatprep.subr.bf16.mxu0 0
  %249 = vmatpush1.bf16.msra.mxu0 0
  %250 = vmatprep.subr.bf16.mxu0 0
  %251 = vmatpush1.bf16.msra.mxu0 0
  %252 = vmatprep.mubr.bf16.mxu0 0
  %253 = vmatmul.mubr.bf16.gmra.mrb[0].mxu0 %v56
  %v254 = vpop.f32.mrb[0].mxu0
  %v255 = vadd.f32 0.0, %v254
  %v256 = vpop.f32.mrb[0].mxu0
  %v257 = vadd.f32 0.0, %v256
  %v258 = vpop.f32.mrb[0].mxu0
  %v259 = vadd.f32 0.0, %v258
  %v260 = vpop.f32.mrb[0].mxu0
  %v261 = vadd.f32 0.0, %v260
  %262 = vmatprep.mubr.bf16.mxu0 0
  %263 = vmatmul.mubr.bf16.gmra.mrb[0].mxu0 %v57
  %v264 = vpop.f32.mrb[0].mxu0
  %v265 = vadd.f32 0.0, %v264
  %v266 = vpop.f32.mrb[0].mxu0
  %v267 = vadd.f32 0.0, %v266
  %v268 = vpop.f32.mrb[0].mxu0
  %v269 = vadd.f32 0.0, %v268
  %v270 = vpop.f32.mrb[0].mxu0
  %v271 = vadd.f32 0.0, %v270
  %272 = vdwg.mxu0
  %273 = vmatprep.subr.bf16.mxu0 %v159
  %274 = vmatpush1.bf16.msra.mxu0 %v158
  %275 = vmatprep.subr.bf16.mxu0 %v163
  %276 = vmatpush1.bf16.msra.mxu0 %v162
  %277 = vmatprep.subr.bf16.mxu0 %v167
  %278 = vmatpush1.bf16.msra.mxu0 %v166
  %279 = vmatprep.subr.bf16.mxu0 %v171
  %280 = vmatpush1.bf16.msra.mxu0 %v170
  %281 = vmatprep.subr.bf16.mxu0 %v175
  %282 = vmatpush1.bf16.msra.mxu0 %v174
  %283 = vmatprep.subr.bf16.mxu0 %v179
  %284 = vmatpush1.bf16.msra.mxu0 %v178
  %285 = vmatprep.subr.bf16.mxu0 %v183
  %286 = vmatpush1.bf16.msra.mxu0 %v182
  %287 = vmatprep.subr.bf16.mxu0 %v187
  %288 = vmatpush1.bf16.msra.mxu0 %v186
  %289 = vmatprep.subr.bf16.mxu0 0
  %290 = vmatpush1.bf16.msra.mxu0 0
  %291 = vmatprep.subr.bf16.mxu0 0
  %292 = vmatpush1.bf16.msra.mxu0 0
  %293 = vmatprep.subr.bf16.mxu0 0
  %294 = vmatpush1.bf16.msra.mxu0 0
  %295 = vmatprep.subr.bf16.mxu0 0
  %296 = vmatpush1.bf16.msra.mxu0 0
  %297 = vmatprep.subr.bf16.mxu0 0
  %298 = vmatpush1.bf16.msra.mxu0 0
  %299 = vmatprep.subr.bf16.mxu0 0
  %300 = vmatpush1.bf16.msra.mxu0 0
  %301 = vmatprep.subr.bf16.mxu0 0
  %302 = vmatpush1.bf16.msra.mxu0 0
  %303 = vmatprep.subr.bf16.mxu0 0
  %304 = vmatpush1.bf16.msra.mxu0 0
  %305 = vmatprep.mubr.bf16.mxu0 0
  %306 = vmatmul.mubr.bf16.gmra.mrb[0].mxu0 %v56
  %v307 = vpop.f32.mrb[0].mxu0
  %v308 = vadd.f32 0.0, %v307
  %v309 = vpop.f32.mrb[0].mxu0
  %v310 = vadd.f32 0.0, %v309
  %v311 = vpop.f32.mrb[0].mxu0
  %v312 = vadd.f32 0.0, %v311
  %v313 = vpop.f32.mrb[0].mxu0
  %v314 = vadd.f32 0.0, %v313
  %315 = vmatprep.mubr.bf16.mxu0 0
  %316 = vmatmul.mubr.bf16.gmra.mrb[0].mxu0 %v57
  %v317 = vpop.f32.mrb[0].mxu0
  %v318 = vadd.f32 0.0, %v317
  %v319 = vpop.f32.mrb[0].mxu0
  %v320 = vadd.f32 0.0, %v319
  %v321 = vpop.f32.mrb[0].mxu0
  %v322 = vadd.f32 0.0, %v321
  %v323 = vpop.f32.mrb[0].mxu0
  %v324 = vadd.f32 0.0, %v323
  %325 = vdwg.mxu0
  %v326 = vpack.c.bf16 %v259, %v255
  %v327 = vpack.c.bf16 %v261, %v257
  %v328 = vpack.c.bf16 %v312, %v308
  %v329 = vpack.c.bf16 %v314, %v310
  %v330 = vpack.c.bf16 %v269, %v265
  %v331 = vpack.c.bf16 %v271, %v267
  %v332 = vpack.c.bf16 %v322, %v318
  %v333 = vpack.c.bf16 %v324, %v320
  %v342 = vunpack.c.l.b16 %v326
  %v343 = vunpack.c.l.b16 %v327
  %v344 = vunpack.c.l.b16 %v328
  %v345 = vunpack.c.l.b16 %v329
  %v346 = vunpack.c.h.b16 %v326
  %v347 = vunpack.c.h.b16 %v327
  %v348 = vunpack.c.h.b16 %v328
  %v349 = vunpack.c.h.b16 %v329
  %v350 = vunpack.c.l.b16 %v330
  %v351 = vunpack.c.l.b16 %v331
  %v352 = vunpack.c.l.b16 %v332
  %v353 = vunpack.c.l.b16 %v333
  %v354 = vunpack.c.h.b16 %v330
  %v355 = vunpack.c.h.b16 %v331
  %v356 = vunpack.c.h.b16 %v332
  %v357 = vunpack.c.h.b16 %v333
  %v358 = vpack.c.b16 %v343, %v342
  %v359 = vpack.c.b16 %v345, %v344
  %v360 = vpack.c.b16 %v347, %v346
  %v361 = vpack.c.b16 %v349, %v348
  %v362 = vpack.c.b16 %v351, %v350
  %v363 = vpack.c.b16 %v353, %v352
  %v364 = vpack.c.b16 %v355, %v354
  %v365 = vpack.c.b16 %v357, %v356
  %374 = vst [vmem:[%s2] sm:$0xff] %v358
  %375 = vst [vmem:[%s2 + $0x8] sm:$0xff] %v359
  %376 = vst [vmem:[%s2 + $0x10] sm:$0xff] %v360
  %377 = vst [vmem:[%s2 + $0x18] sm:$0xff] %v361
  %378 = vst [vmem:[%s2 + $0x20] sm:$0xff] %v362
  %379 = vst [vmem:[%s2 + $0x28] sm:$0xff] %v363
  %380 = vst [vmem:[%s2 + $0x30] sm:$0xff] %v364
  %381 = vst [vmem:[%s2 + $0x38] sm:$0xff] %v365
  // Predicated region
  $region10: #{biaffine_forward.2} parent=0 // pred_check
    _
  $region11: #{biaffine_forward.2} parent=0 // pred_check_branch
    %383 = sbr.rel (0) target = $region13
  $region12: #{biaffine_forward.2} parent=0 // pred_region
    _
  $region13: #{biaffine_forward.2} parent=0 // pred_fallthru
    _
  // Predicated region
  $region14: #{biaffine_forward.2} parent=0 // pred_check
    _
  $region15: #{biaffine_forward.2} parent=0 // pred_check_branch
    %385 = sbr.rel (0) target = $region17
  $region16: #{biaffine_forward.2} parent=0 // pred_region
    _
  $region17: #{biaffine_forward.2} parent=0 // pred_fallthru
    _

</llo_original>
